<compile_context>
chip_gen: v5e
topology: v5e:2x2
jax: 0.10.0
libtpu: 0.0.40
codegen_flags: <defaults>
</compile_context>

<pallas_src>
import jax
import jax.numpy as jnp
from jax.experimental import pallas as pl
from jax.experimental.pallas import tpu as pltpu


def _round_up(x, m):
    return (x + m - 1) // m * m


def joint_kernel(enc_ref, dec_ref, w1e_ref, w1d_ref, b1_ref, w2_ref, b2_ref,
                 out_ref, h_ref):
    # enc_ref: (1, tT, D_enc)   dec_ref: (1, tU, D_dec)
    # w1e_ref: (D_enc, Jp)      w1d_ref: (D_dec, Jp)     b1_ref: (1, Jp)
    # w2_ref : (Jp, tV)         b2_ref : (1, tV)
    # out_ref: (1, tT, tU, tV)  h_ref  : (tT*tU, Jp) scratch (compute dtype)
    v = pl.program_id(3)
    tT = enc_ref.shape[1]
    tU = dec_ref.shape[1]

    @pl.when(v == 0)
    def _build_hidden():
        # First linear, split over the concatenated feature dim (MXU, f32 acc).
        ep = jnp.dot(enc_ref[0], w1e_ref[...],
                     preferred_element_type=jnp.float32)           # (tT, Jp)
        ep = ep + b1_ref[0][None, :]          # fold b1 on (tT, Jp), not (tT,tU,Jp)
        dp = jnp.dot(dec_ref[0], w1d_ref[...],
                     preferred_element_type=jnp.float32)           # (tU, Jp)
        # Broadcast-add over the (tT, tU) lattice + ReLU (VPU, f32).
        h = jnp.maximum(ep[:, None, :] + dp[None, :, :], 0.0)      # (tT, tU, Jp)
        h_ref[...] = h.reshape(tT * tU, h.shape[-1]).astype(h_ref.dtype)

    # Second linear on the MXU: (tT*tU, Jp) @ (Jp, tV), f32 accumulation.
    out = jnp.dot(h_ref[...], w2_ref[...], preferred_element_type=jnp.float32)
    out = out + b2_ref[0][None, :]
    out_ref[0] = out.reshape(tT, tU, out.shape[-1]).astype(out_ref.dtype)


def joint_network(encoder_out, decoder_out, w1, b1, w2, b2,
                  *, compute_dtype=jnp.bfloat16, out_dtype=jnp.float32):
    """encoder_out: (B,T,D_enc), decoder_out: (B,U,D_dec).

    w1: (J, D_enc+D_dec), b1: (J,), w2: (V, J), b2: (V,)  (PyTorch Linear layout).
    Returns (B, T, U, V) logits in `out_dtype`.
    """
    B, T, D_enc = encoder_out.shape
    _, U, D_dec = decoder_out.shape
    J = w1.shape[0]
    V = w2.shape[0]

    # ---- tile sizes (respect the (8, 128) layout rule) --------------------
    tT = min(128, _round_up(T, 8))
    tU = min(32, _round_up(U, 8))
    Jp = _round_up(J, 128)
    tV = min(512, _round_up(V, 128))
    Tp = _round_up(T, tT)
    Up = _round_up(U, tU)
    Vp = _round_up(V, tV)

    # ---- weight prep (plain-JAX glue): split W1, transpose, zero-pad ------
    w1e = jnp.zeros((D_enc, Jp), jnp.float32).at[:, :J].set(
        jnp.asarray(w1[:, :D_enc], jnp.float32).T)
    w1d = jnp.zeros((D_dec, Jp), jnp.float32).at[:, :J].set(
        jnp.asarray(w1[:, D_enc:], jnp.float32).T)
    b1r = jnp.zeros((1, Jp), jnp.float32).at[0, :J].set(
        jnp.asarray(b1, jnp.float32))
    w2t = jnp.zeros((Jp, Vp), jnp.float32).at[:J, :V].set(
        jnp.asarray(w2, jnp.float32).T).astype(compute_dtype)
    b2r = jnp.zeros((1, Vp), jnp.float32).at[0, :V].set(
        jnp.asarray(b2, jnp.float32))

    enc_p = jnp.pad(jnp.asarray(encoder_out, jnp.float32),
                    ((0, 0), (0, Tp - T), (0, 0)))
    dec_p = jnp.pad(jnp.asarray(decoder_out, jnp.float32),
                    ((0, 0), (0, Up - U), (0, 0)))

    grid = (B, Tp // tT, Up // tU, Vp // tV)

    cost = pl.CostEstimate(
        flops=2 * B * Tp * Up * Jp * Vp
              + 2 * B * (Tp * D_enc + Up * D_dec) * Jp,
        transcendentals=0,
        bytes_accessed=4 * B * (Tp * D_enc + Up * D_dec)
                       + 4 * B * Tp * Up * Vp
                       + 4 * (D_enc + D_dec + 1) * Jp
                       + 2 * Jp * Vp + 4 * Vp,
    )

    grid_spec = pltpu.PrefetchScalarGridSpec(
        num_scalar_prefetch=0,
        grid=grid,
        in_specs=[
            pl.BlockSpec((1, tT, D_enc), lambda b, i, j, v: (b, i, 0)),
            pl.BlockSpec((1, tU, D_dec), lambda b, i, j, v: (b, j, 0)),
            pl.BlockSpec((D_enc, Jp), lambda b, i, j, v: (0, 0)),
            pl.BlockSpec((D_dec, Jp), lambda b, i, j, v: (0, 0)),
            pl.BlockSpec((1, Jp), lambda b, i, j, v: (0, 0)),
            pl.BlockSpec((Jp, tV), lambda b, i, j, v: (0, v)),
            pl.BlockSpec((1, tV), lambda b, i, j, v: (0, v)),
        ],
        out_specs=pl.BlockSpec((1, tT, tU, tV), lambda b, i, j, v: (b, i, j, v)),
        scratch_shapes=[pltpu.VMEM((tT * tU, Jp), compute_dtype)],
    )

    out_padded = pl.pallas_call(
        joint_kernel,
        out_shape=jax.ShapeDtypeStruct((B, Tp, Up, Vp), out_dtype),
        grid_spec=grid_spec,
        compiler_params=pltpu.CompilerParams(
            dimension_semantics=("parallel", "parallel", "parallel", "arbitrary"),
            vmem_limit_bytes=48 * 1024 * 1024,
        ),
        cost_estimate=cost,
    )(enc_p, dec_p, w1e, w1d, b1r, w2t, b2r)

    # Strip the T / U / V padding (plain-JAX glue).
    return out_padded[:, :T, :U, :V]


def joint_network_ref(encoder_out, decoder_out, w1, b1, w2, b2):
    """Pure-JAX reference matching the PyTorch JointNetwork forward exactly."""
    B, T, D_enc = encoder_out.shape
    _, U, D_dec = decoder_out.shape
    enc = jnp.broadcast_to(encoder_out[:, :, None, :], (B, T, U, D_enc))
    dec = jnp.broadcast_to(decoder_out[:, None, :, :], (B, T, U, D_dec))
    joint = jnp.concatenate((enc, dec), axis=-1)
    h = jnp.maximum(joint @ w1.T + b1, 0.0)
    return h @ w2.T + b2


if __name__ == "__main__":
    # Small shapes consistent with the module.
    B, T, U = 2, 8, 8
    encoder_dim, decoder_dim, joint_dim, vocab_size = 16, 16, 32, 64

    key = jax.random.PRNGKey(0)
    k_enc, k_dec, k_w1, k_b1, k_w2, k_b2 = jax.random.split(key, 6)

    encoder_out = jax.random.normal(k_enc, (B, T, encoder_dim), jnp.float32)
    decoder_out = jax.random.normal(k_dec, (B, U, decoder_dim), jnp.float32)

    # Deterministic parameters (PyTorch nn.Linear weight layout: (out, in)).
    w1 = 0.1 * jax.random.normal(k_w1, (joint_dim, encoder_dim + decoder_dim),
                                 jnp.float32)
    b1 = 0.1 * jax.random.normal(k_b1, (joint_dim,), jnp.float32)
    w2 = 0.1 * jax.random.normal(k_w2, (vocab_size, joint_dim), jnp.float32)
    b2 = 0.1 * jax.random.normal(k_b2, (vocab_size,), jnp.float32)

    ref = joint_network_ref(encoder_out, decoder_out, w1, b1, w2, b2)

    # Exact f32 compute path (tight tolerance).
    out_f32 = jax.block_until_ready(
        joint_network(encoder_out, decoder_out, w1, b1, w2, b2,
                      compute_dtype=jnp.float32))
    assert out_f32.shape == (B, T, U, vocab_size), out_f32.shape
    assert jnp.allclose(out_f32, ref, atol=1e-4, rtol=1e-4), \
        float(jnp.max(jnp.abs(out_f32 - ref)))

    # Default perf path: bf16 MXU operands, f32 accumulation.
    out_bf16 = jax.block_until_ready(
        joint_network(encoder_out, decoder_out, w1, b1, w2, b2))
    assert out_bf16.shape == (B, T, U, vocab_size), out_bf16.shape
    assert jnp.allclose(out_bf16, ref, atol=2e-2, rtol=2e-2), \
        float(jnp.max(jnp.abs(out_bf16 - ref)))

    print("KERNEL_OK")
</pallas_src>

<mosaic_0001>
module attributes {stable_mosaic.version = 11 : i64} {
  func.func @joint_kernel(%arg0: i32, %arg1: i32, %arg2: i32, %arg3: i32, %arg4: memref<1x8x16xf32, #tpu.memory_space<vmem>>, %arg5: memref<1x8x16xf32, #tpu.memory_space<vmem>>, %arg6: memref<16x128xf32, #tpu.memory_space<vmem>>, %arg7: memref<16x128xf32, #tpu.memory_space<vmem>>, %arg8: memref<1x128xf32, #tpu.memory_space<vmem>>, %arg9: memref<128x128xf32, #tpu.memory_space<vmem>>, %arg10: memref<1x128xf32, #tpu.memory_space<vmem>>, %arg11: memref<1x8x8x128xf32, #tpu.memory_space<vmem>>, %arg12: memref<64x128xf32, #tpu.memory_space<vmem>>) attributes {dimension_semantics = [#tpu.dimension_semantics<parallel>, #tpu.dimension_semantics<parallel>, #tpu.dimension_semantics<parallel>, #tpu.dimension_semantics<arbitrary>], iteration_bounds = array<i64: 2, 1, 1, 1>, scalar_prefetch = 0 : i64, scratch_operands = 1 : i64, tpu.core_type = #tpu.core_type<tc>, window_params = [{transform_indices = @transform_0, window_bounds = array<i64: 1, 8, 16>}, {transform_indices = @transform_1, window_bounds = array<i64: 1, 8, 16>}, {pipeline_mode = #tpu.pipeline_mode<synchronous>, transform_indices = @transform_2, window_bounds = array<i64: 16, 128>}, {pipeline_mode = #tpu.pipeline_mode<synchronous>, transform_indices = @transform_3, window_bounds = array<i64: 16, 128>}, {pipeline_mode = #tpu.pipeline_mode<synchronous>, transform_indices = @transform_4, window_bounds = array<i64: 1, 128>}, {transform_indices = @transform_5, window_bounds = array<i64: 128, 128>}, {transform_indices = @transform_6, window_bounds = array<i64: 1, 128>}, {transform_indices = @transform_7, window_bounds = array<i64: 1, 8, 8, 128>}]} {
    %c0_i32 = arith.constant 0 : i32
    %0 = arith.cmpi eq, %arg3, %c0_i32 : i32
    %1 = arith.extui %0 : i1 to i32
    %c0_i32_0 = arith.constant 0 : i32
    %2 = arith.cmpi ne, %1, %c0_i32_0 : i32
    scf.if %2 {
      %c0_10 = arith.constant 0 : index
      %c0_11 = arith.constant 0 : index
      %c0_12 = arith.constant 0 : index
      %15 = vector.load %arg4[%c0_10, %c0_11, %c0_12] : memref<1x8x16xf32, #tpu.memory_space<vmem>>, vector<1x8x16xf32>
      %16 = vector.shape_cast %15 : vector<1x8x16xf32> to vector<8x16xf32>
      %c0_13 = arith.constant 0 : index
      %c0_14 = arith.constant 0 : index
      %17 = vector.load %arg6[%c0_13, %c0_14] : memref<16x128xf32, #tpu.memory_space<vmem>>, vector<16x128xf32>
      %cst_15 = arith.constant dense<0.000000e+00> : vector<8x128xf32>
      %18 = tpu.matmul %16, %17, %cst_15 {dimension_numbers = #tpu.dot_dimension_numbers<[1], [0], [0], [1], [0, 0, 1, 1], [], []>} : vector<8x16xf32>, vector<16x128xf32>, vector<8x128xf32> -> vector<8x128xf32>
      %c0_16 = arith.constant 0 : index
      %c0_17 = arith.constant 0 : index
      %19 = vector.load %arg8[%c0_16, %c0_17] : memref<1x128xf32, #tpu.memory_space<vmem>>, vector<1x128xf32>
      %20 = vector.shape_cast %19 : vector<1x128xf32> to vector<128xf32>
      %21 = vector.shape_cast %20 : vector<128xf32> to vector<1x128xf32>
      %22 = vector.broadcast %21 : vector<1x128xf32> to vector<8x128xf32>
      %23 = arith.addf %18, %22 : vector<8x128xf32>
      %c0_18 = arith.constant 0 : index
      %c0_19 = arith.constant 0 : index
      %c0_20 = arith.constant 0 : index
      %24 = vector.load %arg5[%c0_18, %c0_19, %c0_20] : memref<1x8x16xf32, #tpu.memory_space<vmem>>, vector<1x8x16xf32>
      %25 = vector.shape_cast %24 : vector<1x8x16xf32> to vector<8x16xf32>
      %c0_21 = arith.constant 0 : index
      %c0_22 = arith.constant 0 : index
      %26 = vector.load %arg7[%c0_21, %c0_22] : memref<16x128xf32, #tpu.memory_space<vmem>>, vector<16x128xf32>
      %cst_23 = arith.constant dense<0.000000e+00> : vector<8x128xf32>
      %27 = tpu.matmul %25, %26, %cst_23 {dimension_numbers = #tpu.dot_dimension_numbers<[1], [0], [0], [1], [0, 0, 1, 1], [], []>} : vector<8x16xf32>, vector<16x128xf32>, vector<8x128xf32> -> vector<8x128xf32>
      %28 = vector.shape_cast %23 : vector<8x128xf32> to vector<8x1x128xf32>
      %29 = vector.shape_cast %27 : vector<8x128xf32> to vector<1x8x128xf32>
      %30 = vector.broadcast %28 : vector<8x1x128xf32> to vector<8x8x128xf32>
      %31 = vector.broadcast %29 : vector<1x8x128xf32> to vector<8x8x128xf32>
      %32 = arith.addf %30, %31 : vector<8x8x128xf32>
      %cst_24 = arith.constant 0.000000e+00 : f32
      %33 = vector.broadcast %cst_24 : f32 to vector<8x8x128xf32>
      %34 = arith.maximumf %32, %33 : vector<8x8x128xf32>
      %35 = vector.shape_cast %34 : vector<8x8x128xf32> to vector<64x128xf32>
      %c0_25 = arith.constant 0 : index
      %c0_26 = arith.constant 0 : index
      %36 = vector.load %arg12[%c0_25, %c0_26] : memref<64x128xf32, #tpu.memory_space<vmem>>, vector<64x128xf32>
      tpu.vector_store %arg12[%c0_25, %c0_26], %35 {strides = array<i32>} : memref<64x128xf32, #tpu.memory_space<vmem>>, vector<64x128xf32>,
    } else {
    }
    %c0 = arith.constant 0 : index
    %c0_1 = arith.constant 0 : index
    %3 = vector.load %arg12[%c0, %c0_1] : memref<64x128xf32, #tpu.memory_space<vmem>>, vector<64x128xf32>
    %c0_2 = arith.constant 0 : index
    %c0_3 = arith.constant 0 : index
    %4 = vector.load %arg9[%c0_2, %c0_3] : memref<128x128xf32, #tpu.memory_space<vmem>>, vector<128x128xf32>
    %cst = arith.constant dense<0.000000e+00> : vector<64x128xf32>
    %5 = tpu.matmul %3, %4, %cst {dimension_numbers = #tpu.dot_dimension_numbers<[1], [0], [0], [1], [0, 0, 1, 1], [], []>} : vector<64x128xf32>, vector<128x128xf32>, vector<64x128xf32> -> vector<64x128xf32>
    %c0_4 = arith.constant 0 : index
    %c0_5 = arith.constant 0 : index
    %6 = vector.load %arg10[%c0_4, %c0_5] : memref<1x128xf32, #tpu.memory_space<vmem>>, vector<1x128xf32>
    %7 = vector.shape_cast %6 : vector<1x128xf32> to vector<128xf32>
    %8 = vector.shape_cast %7 : vector<128xf32> to vector<1x128xf32>
    %9 = vector.broadcast %8 : vector<1x128xf32> to vector<64x128xf32>
    %10 = arith.addf %5, %9 : vector<64x128xf32>
    %11 = vector.shape_cast %10 : vector<64x128xf32> to vector<8x8x128xf32>
    %c0_6 = arith.constant 0 : index
    %c0_7 = arith.constant 0 : index
    %c0_8 = arith.constant 0 : index
    %c0_9 = arith.constant 0 : index
    %12 = vector.load %arg11[%c0_6, %c0_7, %c0_8, %c0_9] : memref<1x8x8x128xf32, #tpu.memory_space<vmem>>, vector<1x8x8x128xf32>
    %13 = vector.shape_cast %12 : vector<1x8x8x128xf32> to vector<8x8x128xf32>
    %14 = vector.shape_cast %11 : vector<8x8x128xf32> to vector<1x8x8x128xf32>
    tpu.vector_store %arg11[%c0_6, %c0_7, %c0_8, %c0_9], %14 {strides = array<i32>} : memref<1x8x8x128xf32, #tpu.memory_space<vmem>>, vector<1x8x8x128xf32>,
    return
  }
  func.func @transform_0(%arg0: i32, %arg1: i32, %arg2: i32, %arg3: i32) -> (i32, i32, i32) {
    %c0_i32 = arith.constant 0 : i32
    %c0_i32_0 = arith.constant 0 : i32
    return %arg0, %arg1, %c0_i32 : i32, i32, i32
  }
  func.func @transform_1(%arg0: i32, %arg1: i32, %arg2: i32, %arg3: i32) -> (i32, i32, i32) {
    %c0_i32 = arith.constant 0 : i32
    %c0_i32_0 = arith.constant 0 : i32
    return %arg0, %arg2, %c0_i32 : i32, i32, i32
  }
  func.func @transform_2(%arg0: i32, %arg1: i32, %arg2: i32, %arg3: i32) -> (i32, i32) {
    %c0_i32 = arith.constant 0 : i32
    %c0_i32_0 = arith.constant 0 : i32
    %c0_i32_1 = arith.constant 0 : i32
    return %c0_i32, %c0_i32_0 : i32, i32
  }
  func.func @transform_3(%arg0: i32, %arg1: i32, %arg2: i32, %arg3: i32) -> (i32, i32) {
    %c0_i32 = arith.constant 0 : i32
    %c0_i32_0 = arith.constant 0 : i32
    %c0_i32_1 = arith.constant 0 : i32
    return %c0_i32, %c0_i32_0 : i32, i32
  }
  func.func @transform_4(%arg0: i32, %arg1: i32, %arg2: i32, %arg3: i32) -> (i32, i32) {
    %c0_i32 = arith.constant 0 : i32
    %c0_i32_0 = arith.constant 0 : i32
    %c0_i32_1 = arith.constant 0 : i32
    return %c0_i32, %c0_i32_0 : i32, i32
  }
  func.func @transform_5(%arg0: i32, %arg1: i32, %arg2: i32, %arg3: i32) -> (i32, i32) {
    %c0_i32 = arith.constant 0 : i32
    %c0_i32_0 = arith.constant 0 : i32
    return %c0_i32, %arg3 : i32, i32
  }
  func.func @transform_6(%arg0: i32, %arg1: i32, %arg2: i32, %arg3: i32) -> (i32, i32) {
    %c0_i32 = arith.constant 0 : i32
    %c0_i32_0 = arith.constant 0 : i32
    return %c0_i32, %arg3 : i32, i32
  }
  func.func @transform_7(%arg0: i32, %arg1: i32, %arg2: i32, %arg3: i32) -> (i32, i32, i32, i32) {
    %c0_i32 = arith.constant 0 : i32
    return %arg0, %arg1, %arg2, %arg3 : i32, i32, i32, i32
  }
}

</mosaic_0001>

<llo_original>
// kernel: tpu_custom_call.1
$region0: #{tpu_custom_call.1}
  #allocation0 [shape = 'u32[]', space=smem, size = 0x4, offset = 0x4, fixed_abs, tag = 'smem constant byte address 0x4 - core index']
  #allocation1 [shape = 'u32[72,128]{1,0:T(1,128)}', space=vmem, size = 0x9000, scoped, tag = 'internal scratch']
  #allocation2 [shape = 'f32[64,128]{1,0:T(8,128)}', space=vmem, size = 0x8000, scoped, tag = 'scratch operand']
  %s0 = inlined_call_operand.hbm [shape: f32[2,8,16], index: 0, kind: input, shape index: {}]
  %s1 = inlined_call_operand.hbm [shape: f32[2,8,16], index: 1, kind: input, shape index: {}]
  %s2 = inlined_call_operand.hbm [shape: f32[16,128], index: 2, kind: input, shape index: {}]
  %s3 = inlined_call_operand.hbm [shape: f32[16,128], index: 3, kind: input, shape index: {}]
  %s4 = inlined_call_operand.vmem [shape: f32[1,128], index: 4, kind: input, shape index: {}]
  %s5 = inlined_call_operand.hbm [shape: f32[128,128], index: 5, kind: input, shape index: {}]
  %s6 = inlined_call_operand.vmem [shape: f32[1,128], index: 6, kind: input, shape index: {}]
  %s7 = inlined_call_operand.hbm [shape: f32[2,8,8,128], index: 7, kind: output, shape index: {}]
  %s8 = sld [smem:[#allocation0]]
  $region85: #{tpu_custom_call.1} parent=0
    _
  %s10 = ssub.s32 1, %s8
  %s11 = scalar_select 0, %s10, %s8
  $region1: #{tpu_custom_call.1} parent=0
    #allocation3 [shape = 'u8[8192]{0}', space=vmem, size = 0x2000, scoped, tag = 'input window, operand 0']
    #allocation4 [shape = 's32[2]{0}', space=sflag, size = 0x8, scoped, tag = 'scoped memory for tpu_custom_call.1']
    #allocation5 [shape = 's32[2]{0}', space=sflag, size = 0x8, scoped, tag = 'scoped memory for tpu_custom_call.1']
    #allocation6 [shape = 'u8[8192]{0}', space=vmem, size = 0x2000, scoped, tag = 'input window, operand 1']
    #allocation7 [shape = 's32[2]{0}', space=sflag, size = 0x8, scoped, tag = 'scoped memory for tpu_custom_call.1']
    #allocation8 [shape = 'u8[8192]{0}', space=vmem, size = 0x2000, scoped, tag = 'input window, operand 2, single buffered']
    #allocation9 [shape = 'u8[8192]{0}', space=vmem, size = 0x2000, scoped, tag = 'input window, operand 3, single buffered']
    #allocation10 [shape = 's32[1]{0}', space=sflag, size = 0x4, scoped, tag = 'scoped memory for tpu_custom_call.1']
    #allocation11 [shape = 'u8[65536]{0}', space=vmem, size = 0x10000, scoped, tag = 'input window, operand 5, single buffered']
    #allocation12 [shape = 'u8[65536]{0}', space=vmem, size = 0x10000, scoped, tag = 'output window, operand 0']
    %12 = vsyncpa [#allocation4], 0
    %s13 = scalar_lea.sflag [#allocation4], 1
    %14 = vsyncpa %s13, 0
    %15 = vsyncpa [#allocation7], 0
    %s16 = scalar_lea.sflag [#allocation7], 1
    %17 = vsyncpa %s16, 0
    %18 = vsyncpa [#allocation10], 0
    %19 = vsyncpa [#allocation5], 0
    %s20 = scalar_lea.sflag [#allocation5], 1
    %21 = vsyncpa %s20, 0
    loop: start=0, step=1, limit=4
    $region2: #{tpu_custom_call.1} parent=1 // loop_pre_header
      _
    $region3: #{tpu_custom_call.1} parent=1 // loop_header
      %s23 = sphi 0, %s27
      %p24 = scmp.ge.s32.totalorder %s23, 4
      %s30 = sphi 0, %s56
      %s31 = sphi 0, %s52
      %s32 = sphi 0, %s48
      %s33 = sphi 0, %s44
      %s34 = sphi 0, %s30
      %s35 = sphi 0, %s31
      %s36 = sphi 0, %s32
      %s37 = sphi 0, %s33
      %s38 = sphi 0, %s34
      %s39 = sphi 0, %s35
      %s40 = sphi 0, %s36
      %s41 = sphi 0, %s37
      %s61 = sphi 0, %s63
      %s64 = sphi 0, %s61
      %s65 = sphi 0, %s64
      %s81 = sphi 0, %s65
      %s89 = sphi 0, %s91
      %s92 = sphi 0, %s89
      %s93 = sphi 0, %s92
      %s109 = sphi 0, %s93
      %s113 = sphi 0, %s113
      %s115 = sphi 0, %s113
      %s116 = sphi 0, %s115
      %s130 = sphi 0, %s116
      %s134 = sphi 0, %s134
      %s136 = sphi 0, %s134
      %s137 = sphi 0, %s136
      %s151 = sphi 0, %s137
      %s155 = sphi 0, %s155
      %s157 = sphi 0, %s155
      %s158 = sphi 0, %s157
      %s172 = sphi 0, %s158
      %s178 = sphi 0, %s180
      %s181 = sphi 0, %s178
      %s182 = sphi 0, %s181
      %s198 = sphi 0, %s182
      %s204 = sphi 0, %s206
      %s207 = sphi 0, %s204
      %s208 = sphi 0, %s207
      %s224 = sphi 0, %s208
      %s236 = sphi 0, %s238
      %s239 = sphi 0, %s236
      %s240 = sphi 0, %s239
      %s256 = sphi 0, %s240
    $region4: #{tpu_custom_call.1} parent=1 // loop_header_branch
      %26 = sbr.rel (%p24) target = $region8
    $region5: #{tpu_custom_call.1} parent=1 // loop_body
      %s28 = ssub.s32 %s23, 1
      %s29 = ssub.s32 %s23, 2
      %s42 = sadd.s32 1, %s33
      %p43 = scmp.ge.s32.totalorder %s42, 1
      %s44 = scalar_select %p43, 0, %s42
      %s45 = sadd.s32 1, %s32
      %s46 = scalar_select %p43, %s45, %s32
      %p47 = scmp.ge.s32.totalorder %s46, 1
      %s48 = scalar_select %p47, 0, %s46
      %s49 = sadd.s32 1, %s31
      %s50 = scalar_select %p47, %s49, %s31
      %p51 = scmp.ge.s32.totalorder %s50, 1
      %s52 = scalar_select %p51, 0, %s50
      %s53 = sadd.s32 1, %s30
      %s54 = scalar_select %p51, %s53, %s30
      %p55 = scmp.ge.s32.totalorder %s54, 2
      %s56 = scalar_select %p55, 0, %s54
      %s57 = ssub.s32 %s30, %s56
      %s58 = ssub.s32 %s31, %s52
      %s59 = sor.u32 %s57, %s58
      %p60 = scmp.eq.s32.totalorder %s59, 0
      %s62 = sadd.s32 %s61, 1
      %s63 = scalar_select %p60, %s61, %s62
      %p66 = pneg %p60
      %p67 = scmp.eq.s32.totalorder %s23, 1
      %p68 = por %p66, %p67
      %p69 = scmp.ne.s32.totalorder %s61, %s64
      %p70 = scmp.eq.s32.totalorder %s23, 0
      %p71 = por %p69, %p70
      %p72 = scmp.ne.s32.totalorder %s61, %s64
      %p73 = scmp.eq.s32.totalorder %s28, 1
      %p74 = por %p72, %p73
      %p75 = scmp.ne.s32.totalorder %s64, %s65
      %p76 = scmp.eq.s32.totalorder %s28, 0
      %p77 = por %p75, %p76
      %p78 = scmp.ne.s32.totalorder %s64, %s65
      %p79 = scmp.eq.s32.totalorder %s29, 1
      %p80 = por %p78, %p79
      %p82 = scmp.ne.s32.totalorder %s65, %s81
      %p83 = scmp.eq.s32.totalorder %s29, 0
      %p84 = por %p82, %p83
      %s85 = ssub.s32 %s30, %s56
      %s86 = ssub.s32 %s32, %s48
      %s87 = sor.u32 %s85, %s86
      %p88 = scmp.eq.s32.totalorder %s87, 0
      %s90 = sadd.s32 %s89, 1
      %s91 = scalar_select %p88, %s89, %s90
      %p94 = pneg %p88
      %p95 = scmp.eq.s32.totalorder %s23, 1
      %p96 = por %p94, %p95
      %p97 = scmp.ne.s32.totalorder %s89, %s92
      %p98 = scmp.eq.s32.totalorder %s23, 0
      %p99 = por %p97, %p98
      %p100 = scmp.ne.s32.totalorder %s89, %s92
      %p101 = scmp.eq.s32.totalorder %s28, 1
      %p102 = por %p100, %p101
      %p103 = scmp.ne.s32.totalorder %s92, %s93
      %p104 = scmp.eq.s32.totalorder %s28, 0
      %p105 = por %p103, %p104
      %p106 = scmp.ne.s32.totalorder %s92, %s93
      %p107 = scmp.eq.s32.totalorder %s29, 1
      %p108 = por %p106, %p107
      %p110 = scmp.ne.s32.totalorder %s93, %s109
      %p111 = scmp.eq.s32.totalorder %s29, 0
      %p112 = por %p110, %p111
      %s114 = sadd.s32 %s113, 1
      %p117 = scmp.eq.s32.totalorder %s23, 1
      %p118 = scmp.ne.s32.totalorder %s113, %s115
      %p119 = scmp.eq.s32.totalorder %s23, 0
      %p120 = por %p118, %p119
      %p121 = scmp.ne.s32.totalorder %s113, %s115
      %p122 = scmp.eq.s32.totalorder %s28, 1
      %p123 = por %p121, %p122
      %p124 = scmp.ne.s32.totalorder %s115, %s116
      %p125 = scmp.eq.s32.totalorder %s28, 0
      %p126 = por %p124, %p125
      %p127 = scmp.ne.s32.totalorder %s115, %s116
      %p128 = scmp.eq.s32.totalorder %s29, 1
      %p129 = por %p127, %p128
      %p131 = scmp.ne.s32.totalorder %s116, %s130
      %p132 = scmp.eq.s32.totalorder %s29, 0
      %p133 = por %p131, %p132
      %s135 = sadd.s32 %s134, 1
      %p138 = scmp.eq.s32.totalorder %s23, 1
      %p139 = scmp.ne.s32.totalorder %s134, %s136
      %p140 = scmp.eq.s32.totalorder %s23, 0
      %p141 = por %p139, %p140
      %p142 = scmp.ne.s32.totalorder %s134, %s136
      %p143 = scmp.eq.s32.totalorder %s28, 1
      %p144 = por %p142, %p143
      %p145 = scmp.ne.s32.totalorder %s136, %s137
      %p146 = scmp.eq.s32.totalorder %s28, 0
      %p147 = por %p145, %p146
      %p148 = scmp.ne.s32.totalorder %s136, %s137
      %p149 = scmp.eq.s32.totalorder %s29, 1
      %p150 = por %p148, %p149
      %p152 = scmp.ne.s32.totalorder %s137, %s151
      %p153 = scmp.eq.s32.totalorder %s29, 0
      %p154 = por %p152, %p153
      %s156 = sadd.s32 %s155, 1
      %p159 = scmp.eq.s32.totalorder %s23, 1
      %p160 = scmp.ne.s32.totalorder %s155, %s157
      %p161 = scmp.eq.s32.totalorder %s23, 0
      %p162 = por %p160, %p161
      %p163 = scmp.ne.s32.totalorder %s155, %s157
      %p164 = scmp.eq.s32.totalorder %s28, 1
      %p165 = por %p163, %p164
      %p166 = scmp.ne.s32.totalorder %s157, %s158
      %p167 = scmp.eq.s32.totalorder %s28, 0
      %p168 = por %p166, %p167
      %p169 = scmp.ne.s32.totalorder %s157, %s158
      %p170 = scmp.eq.s32.totalorder %s29, 1
      %p171 = por %p169, %p170
      %p173 = scmp.ne.s32.totalorder %s158, %s172
      %p174 = scmp.eq.s32.totalorder %s29, 0
      %p175 = por %p173, %p174
      %s176 = ssub.s32 %s33, %s44
      %p177 = scmp.eq.s32.totalorder %s176, 0
      %s179 = sadd.s32 %s178, 1
      %s180 = scalar_select %p177, %s178, %s179
      %p183 = pneg %p177
      %p184 = scmp.eq.s32.totalorder %s23, 1
      %p185 = por %p183, %p184
      %p186 = scmp.ne.s32.totalorder %s178, %s181
      %p187 = scmp.eq.s32.totalorder %s23, 0
      %p188 = por %p186, %p187
      %p189 = scmp.ne.s32.totalorder %s178, %s181
      %p190 = scmp.eq.s32.totalorder %s28, 1
      %p191 = por %p189, %p190
      %p192 = scmp.ne.s32.totalorder %s181, %s182
      %p193 = scmp.eq.s32.totalorder %s28, 0
      %p194 = por %p192, %p193
      %p195 = scmp.ne.s32.totalorder %s181, %s182
      %p196 = scmp.eq.s32.totalorder %s29, 1
      %p197 = por %p195, %p196
      %p199 = scmp.ne.s32.totalorder %s182, %s198
      %p200 = scmp.eq.s32.totalorder %s29, 0
      %p201 = por %p199, %p200
      %s202 = ssub.s32 %s33, %s44
      %p203 = scmp.eq.s32.totalorder %s202, 0
      %s205 = sadd.s32 %s204, 1
      %s206 = scalar_select %p203, %s204, %s205
      %p209 = pneg %p203
      %p210 = scmp.eq.s32.totalorder %s23, 1
      %p211 = por %p209, %p210
      %p212 = scmp.ne.s32.totalorder %s204, %s207
      %p213 = scmp.eq.s32.totalorder %s23, 0
      %p214 = por %p212, %p213
      %p215 = scmp.ne.s32.totalorder %s204, %s207
      %p216 = scmp.eq.s32.totalorder %s28, 1
      %p217 = por %p215, %p216
      %p218 = scmp.ne.s32.totalorder %s207, %s208
      %p219 = scmp.eq.s32.totalorder %s28, 0
      %p220 = por %p218, %p219
      %p221 = scmp.ne.s32.totalorder %s207, %s208
      %p222 = scmp.eq.s32.totalorder %s29, 1
      %p223 = por %p221, %p222
      %p225 = scmp.ne.s32.totalorder %s208, %s224
      %p226 = scmp.eq.s32.totalorder %s29, 0
      %p227 = por %p225, %p226
      %s228 = ssub.s32 %s30, %s56
      %s229 = ssub.s32 %s31, %s52
      %s230 = sor.u32 %s228, %s229
      %s231 = ssub.s32 %s32, %s48
      %s232 = sor.u32 %s230, %s231
      %s233 = ssub.s32 %s33, %s44
      %s234 = sor.u32 %s232, %s233
      %p235 = scmp.eq.s32.totalorder %s234, 0
      %s237 = sadd.s32 %s236, 1
      %s238 = scalar_select %p235, %s236, %s237
      %p241 = pneg %p235
      %p242 = scmp.eq.s32.totalorder %s23, 1
      %p243 = por %p241, %p242
      %p244 = scmp.ne.s32.totalorder %s236, %s239
      %p245 = scmp.eq.s32.totalorder %s23, 0
      %p246 = por %p244, %p245
      %p247 = scmp.ne.s32.totalorder %s236, %s239
      %p248 = scmp.eq.s32.totalorder %s28, 1
      %p249 = por %p247, %p248
      %p250 = scmp.ne.s32.totalorder %s239, %s240
      %p251 = scmp.eq.s32.totalorder %s28, 0
      %p252 = por %p250, %p251
      %p253 = scmp.ne.s32.totalorder %s239, %s240
      %p254 = scmp.eq.s32.totalorder %s29, 1
      %p255 = por %p253, %p254
      %p257 = scmp.ne.s32.totalorder %s240, %s256
      %p258 = scmp.eq.s32.totalorder %s29, 0
      %p259 = por %p257, %p258
      %p260 = scmp.le.s32.totalorder 1, %s23
      %p261 = scmp.lt.s32.totalorder %s23, 3
      %p262 = pnand %p260, %p261
      %p263 = pneg %p262
      // Predicated region
      $region9: #{tpu_custom_call.1} parent=5 // pred_check
        _
      $region10: #{tpu_custom_call.1} parent=5 // pred_check_branch
        %265 = sbr.rel (%p262) target = $region12
      $region11: #{tpu_custom_call.1} parent=5 // pred_region
        %s266 = ssub.s32 %s23, 1
        // Predicated region
        $region13: #{tpu_custom_call.1} parent=11 // pred_check
          %p267 = pneg %p126
        $region14: #{tpu_custom_call.1} parent=11 // pred_check_branch
          %269 = sbr.rel (%p267) target = $region16
        $region15: #{tpu_custom_call.1} parent=11 // pred_region
          %271 = vsyncadd [#allocation7], 0
          %s272 = sshll.u32 %s2, 4
          %s273 = int_to_ptr.hbm [resolvable:$true] %s272
          %s274 = sshll.u32 [#allocation8], 4
          %s275 = int_to_ptr.vmem [resolvable:$true] %s274
          %280 = dma.hbm_to_vmem [thread:$0]  %s273, 256, %s275, [#allocation7], 128, 128, 8
        $region16: #{tpu_custom_call.1} parent=11 // pred_fallthru
          _
        // Predicated region
        $region17: #{tpu_custom_call.1} parent=11 // pred_check
          %p281 = pneg %p147
        $region18: #{tpu_custom_call.1} parent=11 // pred_check_branch
          %283 = sbr.rel (%p281) target = $region20
        $region19: #{tpu_custom_call.1} parent=11 // pred_region
          %285 = vsyncadd [#allocation10], 0
          %s286 = sshll.u32 %s3, 4
          %s287 = int_to_ptr.hbm [resolvable:$true] %s286
          %s288 = sshll.u32 [#allocation9], 4
          %s289 = int_to_ptr.vmem [resolvable:$true] %s288
          %294 = dma.hbm_to_vmem [thread:$0]  %s287, 256, %s289, [#allocation10], 128, 128, 8
        $region20: #{tpu_custom_call.1} parent=11 // pred_fallthru
          _
        // Predicated region
        $region21: #{tpu_custom_call.1} parent=11 // pred_check
          %p295 = pneg %p168
        $region22: #{tpu_custom_call.1} parent=11 // pred_check_branch
          %297 = sbr.rel (%p295) target = $region24
        $region23: #{tpu_custom_call.1} parent=11 // pred_region
          _
        $region24: #{tpu_custom_call.1} parent=11 // pred_fallthru
          _
        // Predicated region
        $region25: #{tpu_custom_call.1} parent=11 // pred_check
          %p298 = pneg %p194
        $region26: #{tpu_custom_call.1} parent=11 // pred_check_branch
          %300 = sbr.rel (%p298) target = $region28
        $region27: #{tpu_custom_call.1} parent=11 // pred_region
          %302 = vsyncadd [#allocation10], 0
          %s303 = smul.addr %s37, 8
          %s304 = scalar_lea.hbm %s5, %s303
          %s305 = sshll.u32 %s304, 4
          %s306 = int_to_ptr.hbm [resolvable:$true] %s305
          %s307 = sshll.u32 [#allocation11], 4
          %s308 = int_to_ptr.vmem [resolvable:$true] %s307
          %313 = dma.hbm_to_vmem [thread:$0]  %s306, 2048, %s308, [#allocation10], 128, 128, 8
        $region28: #{tpu_custom_call.1} parent=11 // pred_fallthru
          _
        // Predicated region
        $region29: #{tpu_custom_call.1} parent=11 // pred_check
          %p314 = pneg %p220
        $region30: #{tpu_custom_call.1} parent=11 // pred_check_branch
          %316 = sbr.rel (%p314) target = $region32
        $region31: #{tpu_custom_call.1} parent=11 // pred_region
          %p317 = scmp.lt.s32.totalorder %s37, 0
          %s318 = scalar_select %p317, %s37, 0
          %s319 = scalar_lea.vmem %s6, %s318
        $region32: #{tpu_custom_call.1} parent=11 // pred_fallthru
          _
      $region12: #{tpu_custom_call.1} parent=5 // pred_fallthru
        _
      %p320 = scmp.lt.s32.totalorder %s23, 2
      // Predicated region
      $region33: #{tpu_custom_call.1} parent=5 // pred_check
        %p321 = pneg %p320
      $region34: #{tpu_custom_call.1} parent=5 // pred_check_branch
        %323 = sbr.rel (%p321) target = $region36
      $region35: #{tpu_custom_call.1} parent=5 // pred_region
        // Predicated region
        $region37: #{tpu_custom_call.1} parent=35 // pred_check
          %p324 = pneg %p71
        $region38: #{tpu_custom_call.1} parent=35 // pred_check_branch
          %326 = sbr.rel (%p324) target = $region40
        $region39: #{tpu_custom_call.1} parent=35 // pred_region
          %s327 = sand.u32 %s61, 1
          %s328 = scalar_lea.sflag [#allocation4], %s327
          %s329 = sand.u32 %s61, 1
          %s330 = smul.addr %s329, 8
          %s331 = scalar_lea.vmem [#allocation3], %s330
          %333 = vsyncadd %s328, 0
          %s334 = sadd.s32 %s31, %s30
          %s335 = smul.addr %s334, 8
          %s336 = scalar_lea.hbm %s0, %s335
          %s338 = sshll.u32 %s336, 4
          %s339 = int_to_ptr.hbm [resolvable:$true] %s338
          %s340 = sshll.u32 %s331, 4
          %s341 = int_to_ptr.vmem [resolvable:$true] %s340
          %343 = dma.hbm_to_vmem [thread:$0]  %s339, 128, %s341, %s328
        $region40: #{tpu_custom_call.1} parent=35 // pred_fallthru
          _
        // Predicated region
        $region41: #{tpu_custom_call.1} parent=35 // pred_check
          %p344 = pneg %p99
        $region42: #{tpu_custom_call.1} parent=35 // pred_check_branch
          %346 = sbr.rel (%p344) target = $region44
        $region43: #{tpu_custom_call.1} parent=35 // pred_region
          %s347 = sand.u32 %s23, 1
          %s348 = scalar_lea.sflag [#allocation7], %s347
          %s349 = sand.u32 %s89, 1
          %s350 = smul.addr %s349, 8
          %s351 = scalar_lea.vmem [#allocation6], %s350
          %353 = vsyncadd %s348, 0
          %s354 = sadd.s32 %s32, %s30
          %s355 = smul.addr %s354, 8
          %s356 = scalar_lea.hbm %s1, %s355
          %s358 = sshll.u32 %s356, 4
          %s359 = int_to_ptr.hbm [resolvable:$true] %s358
          %s360 = sshll.u32 %s351, 4
          %s361 = int_to_ptr.vmem [resolvable:$true] %s360
          %363 = dma.hbm_to_vmem [thread:$0]  %s359, 128, %s361, %s348
        $region44: #{tpu_custom_call.1} parent=35 // pred_fallthru
          _
      $region36: #{tpu_custom_call.1} parent=5 // pred_fallthru
        _
      %p364 = scmp.le.s32.totalorder 1, %s23
      %p365 = scmp.lt.s32.totalorder %s23, 3
      %p366 = pnand %p364, %p365
      %p367 = pneg %p366
      // Predicated region
      $region45: #{tpu_custom_call.1} parent=5 // pred_check
        _
      $region46: #{tpu_custom_call.1} parent=5 // pred_check_branch
        %369 = sbr.rel (%p366) target = $region48
      $region47: #{tpu_custom_call.1} parent=5 // pred_region
        %s370 = ssub.s32 %s23, 1
        %s371 = sand.u32 %s64, 1
        %s372 = scalar_lea.sflag [#allocation4], %s371
        %s373 = sand.u32 %s64, 1
        %s374 = smul.addr %s373, 8
        %s375 = scalar_lea.vmem [#allocation3], %s374
        // Predicated region
        $region49: #{tpu_custom_call.1} parent=47 // pred_check
          %p376 = pneg %p77
        $region50: #{tpu_custom_call.1} parent=47 // pred_check_branch
          %378 = sbr.rel (%p376) target = $region52
        $region51: #{tpu_custom_call.1} parent=47 // pred_region
          %380 = dma.done %s372, 128
        $region52: #{tpu_custom_call.1} parent=47 // pred_fallthru
          _
        %s381 = sand.u32 %s28, 1
        %s382 = scalar_lea.sflag [#allocation7], %s381
        %s383 = sand.u32 %s92, 1
        %s384 = smul.addr %s383, 8
        %s385 = scalar_lea.vmem [#allocation6], %s384
        // Predicated region
        $region53: #{tpu_custom_call.1} parent=47 // pred_check
          %p386 = pneg %p105
        $region54: #{tpu_custom_call.1} parent=47 // pred_check_branch
          %388 = sbr.rel (%p386) target = $region56
        $region55: #{tpu_custom_call.1} parent=47 // pred_region
          %390 = dma.done %s382, 128
        $region56: #{tpu_custom_call.1} parent=47 // pred_fallthru
          _
        // Predicated region
        $region57: #{tpu_custom_call.1} parent=47 // pred_check
          %p391 = pneg %p126
        $region58: #{tpu_custom_call.1} parent=47 // pred_check_branch
          %393 = sbr.rel (%p391) target = $region60
        $region59: #{tpu_custom_call.1} parent=47 // pred_region
          %395 = dma.done [#allocation7], 256
        $region60: #{tpu_custom_call.1} parent=47 // pred_fallthru
          _
        // Predicated region
        $region61: #{tpu_custom_call.1} parent=47 // pred_check
          %p396 = pneg %p147
        $region62: #{tpu_custom_call.1} parent=47 // pred_check_branch
          %398 = sbr.rel (%p396) target = $region64
        $region63: #{tpu_custom_call.1} parent=47 // pred_region
          %400 = dma.done [#allocation10], 256
        $region64: #{tpu_custom_call.1} parent=47 // pred_fallthru
          _
        // Predicated region
        $region65: #{tpu_custom_call.1} parent=47 // pred_check
          %p401 = pneg %p194
        $region66: #{tpu_custom_call.1} parent=47 // pred_check_branch
          %403 = sbr.rel (%p401) target = $region68
        $region67: #{tpu_custom_call.1} parent=47 // pred_region
          %405 = dma.done [#allocation10], 2048
        $region68: #{tpu_custom_call.1} parent=47 // pred_fallthru
          _
        %s406 = sand.u32 %s64, 1
        %s407 = scalar_lea.sflag [#allocation4], %s406
        %s408 = sand.u32 %s64, 1
        %s409 = smul.addr %s408, 8
        %s410 = scalar_lea.vmem [#allocation3], %s409
        %p411 = pneg %p77
        %p412 = pneg %p74
        %s413 = sand.u32 %s28, 1
        %s414 = scalar_lea.sflag [#allocation7], %s413
        %s415 = sand.u32 %s92, 1
        %s416 = smul.addr %s415, 8
        %s417 = scalar_lea.vmem [#allocation6], %s416
        %p418 = pneg %p105
        %p419 = pneg %p102
        %p420 = pneg %p126
        %p421 = pneg %p123
        %p422 = pneg %p147
        %p423 = pneg %p144
        %p424 = pneg %p168
        %p425 = pneg %p165
        %p426 = pneg %p194
        %p427 = pneg %p191
        %p428 = scmp.lt.s32.totalorder %s37, 0
        %s429 = scalar_select %p428, %s37, 0
        %s430 = scalar_lea.vmem %s6, %s429
        %p431 = pneg %p220
        %p432 = pneg %p217
        %p433 = pneg %p252
        %p434 = pneg %p249
        %s435 = sand.u32 %s239, 1
        %s436 = scalar_lea.sflag [#allocation5], %s435
        %s437 = sand.u32 %s239, 1
        %s438 = smul.addr %s437, 64
        %s439 = scalar_lea.vmem [#allocation12], %s438
        %p440 = scmp.lt.s32.totalorder %s37, 0
        %s441 = scalar_select %p440, %s37, 0
        %s442 = scalar_lea.vmem %s6, %s441
        %s443 = smul.u32 8, %s35
        %p444 = scmp.eq.s32.totalorder %s37, 0
        // Predicated region
        $region69: #{tpu_custom_call.1} parent=47 // pred_check
          %p445 = pneg %p444
        $region70: #{tpu_custom_call.1} parent=47 // pred_check_branch
          %447 = sbr.rel (%p445) target = $region72
        $region71: #{tpu_custom_call.1} parent=47 // pred_region
          %v448 = vld [vmem:[%s375] sm:$0xff]
          %v449 = vld [vmem:[#allocation8] sm:$0xff]
          %v450 = vld [vmem:[#allocation8 + $0x8] sm:$0xff]
          %v451 = vld [vmem:[%s4] sm:$0x1]
          %v453 = vperm.slane %v451, 0
          %vm455 = vcmask 130048
          %v457 = vsel %vm455, %v448, 0
          %459 = vmatpush.msra.mxu0 0.0
          %460 = vmatpush.msra.mxu0 0.0
          %461 = vmatpush.msra.mxu0 0.0
          %462 = vmatpush.msra.mxu0 0.0
          %463 = vmatpush.msra.mxu0 0.0
          %464 = vmatpush.msra.mxu0 0.0
          %465 = vmatpush.msra.mxu0 0.0
          %466 = vmatpush.msra.mxu0 0.0
          %467 = vmatpush.msra.mxu0 0.0
          %468 = vmatpush.msra.mxu0 0.0
          %469 = vmatpush.msra.mxu0 0.0
          %470 = vmatpush.msra.mxu0 0.0
          %471 = vmatpush.msra.mxu0 0.0
          %472 = vmatpush.msra.mxu0 0.0
          %473 = vmatpush.msra.mxu0 %v450
          %474 = vmatpush.msra.mxu0 %v449
          %475 = vmatmul.f32.gmra.mxu0 %v457
          %v476 = vpop.f32.mrf.mxu0
          %v477 = vadd.f32 %v453, %v476
          %478 = vdwg.mxu0
          %v479 = vld [vmem:[%s385] sm:$0xff]
          %v480 = vld [vmem:[#allocation9] sm:$0xff]
          %v481 = vld [vmem:[#allocation9 + $0x8] sm:$0xff]
          %v483 = vsel %vm455, %v479, 0
          %485 = vmatpush.msra.mxu0 0.0
          %486 = vmatpush.msra.mxu0 0.0
          %487 = vmatpush.msra.mxu0 0.0
          %488 = vmatpush.msra.mxu0 0.0
          %489 = vmatpush.msra.mxu0 0.0
          %490 = vmatpush.msra.mxu0 0.0
          %491 = vmatpush.msra.mxu0 0.0
          %492 = vmatpush.msra.mxu0 0.0
          %493 = vmatpush.msra.mxu0 0.0
          %494 = vmatpush.msra.mxu0 0.0
          %495 = vmatpush.msra.mxu0 0.0
          %496 = vmatpush.msra.mxu0 0.0
          %497 = vmatpush.msra.mxu0 0.0
          %498 = vmatpush.msra.mxu0 0.0
          %499 = vmatpush.msra.mxu0 %v481
          %500 = vmatpush.msra.mxu0 %v480
          %501 = vmatmul.f32.gmra.mxu0 %v483
          %v502 = vpop.f32.mrf.mxu0
          %v503 = vadd.f32 0.0, %v502
          %504 = vdwg.mxu0
          %v506 = vrot.slane %v477, 1
          %v507 = vrot.slane %v477, 2
          %v508 = vrot.slane %v477, 3
          %v509 = vrot.slane %v477, 4
          %v510 = vrot.slane %v477, 5
          %v511 = vrot.slane %v477, 6
          %v512 = vrot.slane %v477, 7
          %v513 = vperm.slane %v477, 0
          %v514 = vperm.slane %v506, 0
          %v515 = vperm.slane %v507, 0
          %v516 = vperm.slane %v508, 0
          %v517 = vperm.slane %v509, 0
          %v518 = vperm.slane %v510, 0
          %v519 = vperm.slane %v511, 0
          %v520 = vperm.slane %v512, 0
          %v529 = vadd.f32 %v513, %v503
          %v530 = vadd.f32 %v514, %v503
          %v531 = vadd.f32 %v515, %v503
          %v532 = vadd.f32 %v516, %v503
          %v533 = vadd.f32 %v517, %v503
          %v534 = vadd.f32 %v518, %v503
          %v535 = vadd.f32 %v519, %v503
          %v536 = vadd.f32 %v520, %v503
          %v537 = vmax.f32 %v529, 0.0
          %v538 = vmax.f32 %v530, 0.0
          %v539 = vmax.f32 %v531, 0.0
          %v540 = vmax.f32 %v532, 0.0
          %v541 = vmax.f32 %v533, 0.0
          %v542 = vmax.f32 %v534, 0.0
          %v543 = vmax.f32 %v535, 0.0
          %v544 = vmax.f32 %v536, 0.0
          %545 = vst [vmem:[#allocation2] sm:$0xff] %v537
          %546 = vst [vmem:[#allocation2 + $0x8] sm:$0xff] %v538
          %547 = vst [vmem:[#allocation2 + $0x10] sm:$0xff] %v539
          %548 = vst [vmem:[#allocation2 + $0x18] sm:$0xff] %v540
          %549 = vst [vmem:[#allocation2 + $0x20] sm:$0xff] %v541
          %550 = vst [vmem:[#allocation2 + $0x28] sm:$0xff] %v542
          %551 = vst [vmem:[#allocation2 + $0x30] sm:$0xff] %v543
          %552 = vst [vmem:[#allocation2 + $0x38] sm:$0xff] %v544
        $region72: #{tpu_custom_call.1} parent=47 // pred_fallthru
          _
        %v553 = vld [vmem:[#allocation2] sm:$0xff]
        %v554 = vld [vmem:[#allocation2 + $0x8] sm:$0xff]
        %v555 = vld [vmem:[#allocation2 + $0x10] sm:$0xff]
        %v556 = vld [vmem:[#allocation2 + $0x18] sm:$0xff]
        %v557 = vld [vmem:[#allocation2 + $0x20] sm:$0xff]
        %v558 = vld [vmem:[#allocation2 + $0x28] sm:$0xff]
        %v559 = vld [vmem:[#allocation2 + $0x30] sm:$0xff]
        %v560 = vld [vmem:[#allocation2 + $0x38] sm:$0xff]
        %v561 = vld [vmem:[#allocation11] sm:$0xff]
        %v562 = vld [vmem:[#allocation11 + $0x8] sm:$0xff]
        %v563 = vld [vmem:[#allocation11 + $0x10] sm:$0xff]
        %v564 = vld [vmem:[#allocation11 + $0x18] sm:$0xff]
        %v565 = vld [vmem:[#allocation11 + $0x20] sm:$0xff]
        %v566 = vld [vmem:[#allocation11 + $0x28] sm:$0xff]
        %v567 = vld [vmem:[#allocation11 + $0x30] sm:$0xff]
        %v568 = vld [vmem:[#allocation11 + $0x38] sm:$0xff]
        %v569 = vld [vmem:[#allocation11 + $0x40] sm:$0xff]
        %v570 = vld [vmem:[#allocation11 + $0x48] sm:$0xff]
        %v571 = vld [vmem:[#allocation11 + $0x50] sm:$0xff]
        %v572 = vld [vmem:[#allocation11 + $0x58] sm:$0xff]
        %v573 = vld [vmem:[#allocation11 + $0x60] sm:$0xff]
        %v574 = vld [vmem:[#allocation11 + $0x68] sm:$0xff]
        %v575 = vld [vmem:[#allocation11 + $0x70] sm:$0xff]
        %v576 = vld [vmem:[#allocation11 + $0x78] sm:$0xff]
        %v577 = vld [vmem:[%s442] sm:$0x1]
        %v579 = vperm.slane %v577, 0
        %581 = vmatpush.msra.mxu0 %v576
        %582 = vmatpush.msra.mxu0 %v575
        %583 = vmatpush.msra.mxu0 %v574
        %584 = vmatpush.msra.mxu0 %v573
        %585 = vmatpush.msra.mxu0 %v572
        %586 = vmatpush.msra.mxu0 %v571
        %587 = vmatpush.msra.mxu0 %v570
        %588 = vmatpush.msra.mxu0 %v569
        %589 = vmatpush.msra.mxu0 %v568
        %590 = vmatpush.msra.mxu0 %v567
        %591 = vmatpush.msra.mxu0 %v566
        %592 = vmatpush.msra.mxu0 %v565
        %593 = vmatpush.msra.mxu0 %v564
        %594 = vmatpush.msra.mxu0 %v563
        %595 = vmatpush.msra.mxu0 %v562
        %596 = vmatpush.msra.mxu0 %v561
        %597 = vmatmul.f32.gmra.mxu0 %v553
        %v598 = vpop.f32.mrf.mxu0
        %v599 = vadd.f32 %v579, %v598
        %600 = vmatmul.f32.gmra.mxu0 %v554
        %v601 = vpop.f32.mrf.mxu0
        %v602 = vadd.f32 %v579, %v601
        %603 = vmatmul.f32.gmra.mxu0 %v555
        %v604 = vpop.f32.mrf.mxu0
        %v605 = vadd.f32 %v579, %v604
        %606 = vmatmul.f32.gmra.mxu0 %v556
        %v607 = vpop.f32.mrf.mxu0
        %v608 = vadd.f32 %v579, %v607
        %609 = vmatmul.f32.gmra.mxu0 %v557
        %v610 = vpop.f32.mrf.mxu0
        %v611 = vadd.f32 %v579, %v610
        %612 = vmatmul.f32.gmra.mxu0 %v558
        %v613 = vpop.f32.mrf.mxu0
        %v614 = vadd.f32 %v579, %v613
        %615 = vmatmul.f32.gmra.mxu0 %v559
        %v616 = vpop.f32.mrf.mxu0
        %v617 = vadd.f32 %v579, %v616
        %618 = vmatmul.f32.gmra.mxu0 %v560
        %v619 = vpop.f32.mrf.mxu0
        %v620 = vadd.f32 %v579, %v619
        %621 = vdwg.mxu0
        %622 = vst [vmem:[%s439] sm:$0xff] %v599
        %623 = vst [vmem:[%s439 + $0x8] sm:$0xff] %v602
        %624 = vst [vmem:[%s439 + $0x10] sm:$0xff] %v605
        %625 = vst [vmem:[%s439 + $0x18] sm:$0xff] %v608
        %626 = vst [vmem:[%s439 + $0x20] sm:$0xff] %v611
        %627 = vst [vmem:[%s439 + $0x28] sm:$0xff] %v614
        %628 = vst [vmem:[%s439 + $0x30] sm:$0xff] %v617
        %629 = vst [vmem:[%s439 + $0x38] sm:$0xff] %v620
        %s630 = sand.u32 %s239, 1
        %s631 = scalar_lea.sflag [#allocation5], %s630
        %s632 = sand.u32 %s239, 1
        %s633 = smul.addr %s632, 64
        %s634 = scalar_lea.vmem [#allocation12], %s633
        // Predicated region
        $region73: #{tpu_custom_call.1} parent=47 // pred_check
          %p635 = pneg %p249
        $region74: #{tpu_custom_call.1} parent=47 // pred_check_branch
          %637 = sbr.rel (%p635) target = $region76
        $region75: #{tpu_custom_call.1} parent=47 // pred_region
          %s638 = smul.u32 8, %s35
          %640 = vsyncadd %s631, 0
          %s641 = sadd.s32 %s37, %s36
          %s642 = sadd.s32 %s641, %s638
          %s643 = smul.addr %s34, 8
          %s644 = sadd.s32 %s642, %s643
          %s645 = smul.addr %s644, 8
          %s646 = scalar_lea.hbm %s7, %s645
          %s647 = sshll.u32 %s634, 4
          %s648 = int_to_ptr.vmem [resolvable:$true] %s647
          %s649 = sshll.u32 %s646, 4
          %s650 = int_to_ptr.hbm [resolvable:$true] %s649
          %655 = dma.vmem_to_hbm [thread:$0]  %s648, 1024, %s650, %s631, 128, 128, 8
        $region76: #{tpu_custom_call.1} parent=47 // pred_fallthru
          _
      $region48: #{tpu_custom_call.1} parent=5 // pred_fallthru
        _
      %p656 = scmp.le.s32.totalorder 2, %s23
      // Predicated region
      $region77: #{tpu_custom_call.1} parent=5 // pred_check
        %p657 = pneg %p656
      $region78: #{tpu_custom_call.1} parent=5 // pred_check_branch
        %659 = sbr.rel (%p657) target = $region80
      $region79: #{tpu_custom_call.1} parent=5 // pred_region
        %s660 = ssub.s32 %s23, 2
        // Predicated region
        $region81: #{tpu_custom_call.1} parent=79 // pred_check
          %p661 = pneg %p255
        $region82: #{tpu_custom_call.1} parent=79 // pred_check_branch
          %663 = sbr.rel (%p661) target = $region84
        $region83: #{tpu_custom_call.1} parent=79 // pred_region
          %s664 = sand.u32 %s240, 1
          %s665 = scalar_lea.sflag [#allocation5], %s664
          %s666 = sand.u32 %s240, 1
          %s667 = smul.addr %s666, 64
          %s668 = scalar_lea.vmem [#allocation12], %s667
          %670 = dma.done %s665, 1024
        $region84: #{tpu_custom_call.1} parent=79 // pred_fallthru
          _
      $region80: #{tpu_custom_call.1} parent=5 // pred_fallthru
        _
    $region6: #{tpu_custom_call.1} parent=1 // loop_footer
      %s27 = sadd.s32 1, %s23
    $region7: #{tpu_custom_call.1} parent=1 // loop_footer_branch
      %22 = sbr.rel target = $region3
    $region8: #{tpu_custom_call.1} parent=1 // loop_exit
      _
    %671 = vsyncpa [#allocation4], 1
    %s672 = scalar_lea.sflag [#allocation4], 1
    %673 = vsyncpa %s672, 1
    %674 = vsyncpa [#allocation7], 1
    %s675 = scalar_lea.sflag [#allocation7], 1
    %676 = vsyncpa %s675, 1
    %677 = vsyncpa [#allocation10], 1
    %678 = vsyncpa [#allocation5], 1
    %s679 = scalar_lea.sflag [#allocation5], 1
    %680 = vsyncpa %s679, 1

</llo_original>
